<compile_context>
chip_gen: v7x
topology: tpu7x:2x2x1
jax: 0.10.0
libtpu: 0.0.40
codegen_flags: <defaults>
</compile_context>

<pallas_src>
import functools
from typing import Sequence

import jax
import jax.numpy as jnp
from jax.experimental import pallas as pl
from jax.experimental.pallas import tpu as pltpu


# ----------------------------- Pallas kernel --------------------------------
def _mlp_kernel(x_ref, *refs, activate, out_dims):
    # refs = (w0_ref, w1_ref, ..., w_{L-1}_ref, bias_pack_ref, o_ref)
    o_ref = refs[-1]
    b_ref = refs[-2]          # (L, D_max) f32, rows zero-padded past out_dims[li]
    w_refs = refs[:-2]        # bf16 weights, grid-invariant

    h = x_ref[...]            # (tm, d_in) f32
    for li, act in enumerate(activate):
        d_out = out_dims[li]
        # bf16 MXU inputs, f32 accumulate on the MXU.
        h = jnp.dot(h.astype(jnp.bfloat16), w_refs[li][...],
                    preferred_element_type=jnp.float32)
        # bias-add / ReLU epilogue in f32 (v5e's VPU has no bf16).
        h = h + b_ref[li:li + 1, 0:d_out]
        if act:
            h = jnp.maximum(h, 0.0)
    o_ref[...] = h.astype(o_ref.dtype)


def mlp_forward(x: jax.Array, weights_bf16, bias_pack, activate,
                layer_out_dims) -> jax.Array:
    """Fused forward pass: relu?( ... relu(x @ W0 + b0) @ W1 + b1 ... )."""
    B, d_in = x.shape
    out_dim = layer_out_dims[-1]

    # Batch tiling: a single full-extent tile for small batches (no (8,128)
    # constraint when the block equals the array dim); 128-row tiles with a
    # masked partial last block otherwise (>= 2 "parallel" steps engage both
    # v7x TensorCores once B >= 256).
    tm = B if B <= 128 else 128
    grid = (pl.cdiv(B, tm),)

    in_specs = [pl.BlockSpec((tm, d_in), lambda i: (i, 0))]
    for w in weights_bf16:
        # Grid-invariant: same block every step, Pallas does not re-fetch it.
        in_specs.append(pl.BlockSpec(w.shape, lambda i: (0, 0)))
    in_specs.append(pl.BlockSpec(bias_pack.shape, lambda i: (0, 0)))

    # Advisory cost estimate for XLA's scheduler.
    flops = 2 * B * sum(int(w.shape[0]) * int(w.shape[1]) for w in weights_bf16)
    param_bytes = sum(int(w.size) * 2 for w in weights_bf16) + int(bias_pack.size) * 4
    bytes_accessed = (int(x.size) * 4 + param_bytes + B * out_dim * 4)

    # VMEM budget: inputs are double-buffered by default, so the resident
    # weight stack costs ~2x its size.  Only raise the scoped limit if needed.
    d_max = max(layer_out_dims)
    vmem_needed = (2 * (tm * d_in * 4 + param_bytes + tm * out_dim * 4)
                   + 4 * tm * (d_in + d_max) * 4)
    cp_kwargs = dict(dimension_semantics=("parallel",))
    if vmem_needed > 32 * 1024 * 1024:
        cp_kwargs["vmem_limit_bytes"] = min(2 * vmem_needed, 64 * 1024 * 1024)
    # TODO(synk): for very wide layers (v7x, 64 MiB VMEM) add a K-tiling
    # "arbitrary" grid axis with an f32 VMEM accumulator, single-buffer the
    # grid-invariant weight specs (pipeline_mode=pl.Buffered(1)), and pad
    # feature tiles to 256 on v6e/v7x to fill the 2x256 MXU.

    kernel = functools.partial(_mlp_kernel, activate=tuple(activate),
                               out_dims=tuple(layer_out_dims))

    return pl.pallas_call(
        kernel,
        out_shape=jax.ShapeDtypeStruct((B, out_dim), x.dtype),
        grid=grid,
        in_specs=in_specs,
        out_specs=pl.BlockSpec((tm, out_dim), lambda i: (i, 0)),
        compiler_params=pltpu.CompilerParams(**cp_kwargs),
        cost_estimate=pl.CostEstimate(flops=flops, transcendentals=0,
                                      bytes_accessed=bytes_accessed),
    )(x, *weights_bf16, bias_pack)


# ----------------------------- MLP wrapper -----------------------------------
class MLP:
    """Mirror of the PyTorch MLP: Linear/ReLU stack, last layer optionally
    activated.  Weights are kept in bf16 for the MXU; biases are packed into a
    single f32 (L, D_max) array (bias-add runs in f32)."""

    def __init__(self, input_size: int, hidden_sizes: Sequence[int],
                 activate_last: bool = False, *, key: jax.Array):
        hidden_sizes = list(hidden_sizes)
        last_size = hidden_sizes.pop()            # same mutation as torch code
        sizes = [input_size] + hidden_sizes + [last_size]

        self._activate = tuple([True] * len(hidden_sizes) + [activate_last])
        self._layer_out_dims = tuple(sizes[1:])
        self._params = []                          # exact f32 params (reference)

        d_max = max(sizes[1:])
        n_layers = len(sizes) - 1
        bias_pack = jnp.zeros((n_layers, d_max), jnp.float32)
        weights_bf16 = []
        for li, (d_in, d_out) in enumerate(zip(sizes[:-1], sizes[1:])):
            key, wk, bk = jax.random.split(key, 3)
            # torch.nn.Linear default init: U(-1/sqrt(fan_in), 1/sqrt(fan_in))
            bound = 1.0 / (d_in ** 0.5)
            w = jax.random.uniform(wk, (d_in, d_out), jnp.float32, -bound, bound)
            b = jax.random.uniform(bk, (d_out,), jnp.float32, -bound, bound)
            self._params.append((w, b))
            weights_bf16.append(w.astype(jnp.bfloat16))
            bias_pack = bias_pack.at[li, :d_out].set(b)

        self._weights_bf16 = tuple(weights_bf16)
        self._bias_pack = bias_pack

    def __call__(self, x: jax.Array) -> jax.Array:
        return mlp_forward(x, self._weights_bf16, self._bias_pack,
                           self._activate, self._layer_out_dims)


# --------------------------------- main --------------------------------------
if __name__ == "__main__":
    key = jax.random.PRNGKey(0)
    key, xk, pk = jax.random.split(key, 3)

    batch = 8
    input_size = 32
    hidden_sizes = [64, 32, 16]          # last entry (16) is the output size

    mlp = MLP(input_size, hidden_sizes, activate_last=False, key=pk)

    x = jax.random.normal(xk, (batch, input_size), dtype=jnp.float32)
    out = jax.block_until_ready(mlp(x))

    # Reference with the same bf16 weights / f32 accumulation (plain JAX).
    ref = x
    for (w, b), act in zip(mlp._params, mlp._activate):
        ref = jnp.dot(ref.astype(jnp.bfloat16), w.astype(jnp.bfloat16),
                      preferred_element_type=jnp.float32) + b
        if act:
            ref = jnp.maximum(ref, 0.0)

    assert out.shape == (batch, 16)
    assert jnp.allclose(out, ref, atol=1e-3, rtol=1e-3), \
        float(jnp.max(jnp.abs(out - ref)))

    print("KERNEL_OK")
</pallas_src>

<mosaic_0001>
module attributes {stable_mosaic.version = 11 : i64} {
  func.func @_mlp_kernel(%arg0: i32, %arg1: memref<8x32xf32, #tpu.memory_space<vmem>>, %arg2: memref<32x64xbf16, #tpu.memory_space<vmem>>, %arg3: memref<64x32xbf16, #tpu.memory_space<vmem>>, %arg4: memref<32x16xbf16, #tpu.memory_space<vmem>>, %arg5: memref<3x64xf32, #tpu.memory_space<vmem>>, %arg6: memref<8x16xf32, #tpu.memory_space<vmem>>) attributes {dimension_semantics = [#tpu.dimension_semantics<parallel>], iteration_bounds = array<i64: 1>, scalar_prefetch = 0 : i64, scratch_operands = 0 : i64, tpu.core_type = #tpu.core_type<tc>, window_params = [{transform_indices = @transform_0, window_bounds = array<i64: 8, 32>}, {pipeline_mode = #tpu.pipeline_mode<synchronous>, transform_indices = @transform_1, window_bounds = array<i64: 32, 64>}, {pipeline_mode = #tpu.pipeline_mode<synchronous>, transform_indices = @transform_2, window_bounds = array<i64: 64, 32>}, {pipeline_mode = #tpu.pipeline_mode<synchronous>, transform_indices = @transform_3, window_bounds = array<i64: 32, 16>}, {pipeline_mode = #tpu.pipeline_mode<synchronous>, transform_indices = @transform_4, window_bounds = array<i64: 3, 64>}, {transform_indices = @transform_5, window_bounds = array<i64: 8, 16>}]} {
    %c0 = arith.constant 0 : index
    %c0_0 = arith.constant 0 : index
    %0 = vector.load %arg1[%c0, %c0_0] : memref<8x32xf32, #tpu.memory_space<vmem>>, vector<8x32xf32>
    %1 = arith.truncf %0 : vector<8x32xf32> to vector<8x32xbf16>
    %c0_1 = arith.constant 0 : index
    %c0_2 = arith.constant 0 : index
    %2 = vector.load %arg2[%c0_1, %c0_2] : memref<32x64xbf16, #tpu.memory_space<vmem>>, vector<32x64xbf16>
    %cst = arith.constant dense<0.000000e+00> : vector<8x64xf32>
    %3 = tpu.matmul %1, %2, %cst {dimension_numbers = #tpu.dot_dimension_numbers<[1], [0], [0], [1], [0, 0, 1, 1], [], []>} : vector<8x32xbf16>, vector<32x64xbf16>, vector<8x64xf32> -> vector<8x64xf32>
    %c0_3 = arith.constant 0 : index
    %c0_4 = arith.constant 0 : index
    %4 = vector.load %arg5[%c0_3, %c0_4] : memref<3x64xf32, #tpu.memory_space<vmem>>, vector<1x64xf32>
    %5 = vector.broadcast %4 : vector<1x64xf32> to vector<8x64xf32>
    %6 = arith.addf %3, %5 : vector<8x64xf32>
    %cst_5 = arith.constant 0.000000e+00 : f32
    %7 = vector.broadcast %cst_5 : f32 to vector<8x64xf32>
    %8 = arith.maximumf %6, %7 : vector<8x64xf32>
    %9 = arith.truncf %8 : vector<8x64xf32> to vector<8x64xbf16>
    %c0_6 = arith.constant 0 : index
    %c0_7 = arith.constant 0 : index
    %10 = vector.load %arg3[%c0_6, %c0_7] : memref<64x32xbf16, #tpu.memory_space<vmem>>, vector<64x32xbf16>
    %cst_8 = arith.constant dense<0.000000e+00> : vector<8x32xf32>
    %11 = tpu.matmul %9, %10, %cst_8 {dimension_numbers = #tpu.dot_dimension_numbers<[1], [0], [0], [1], [0, 0, 1, 1], [], []>} : vector<8x64xbf16>, vector<64x32xbf16>, vector<8x32xf32> -> vector<8x32xf32>
    %c1 = arith.constant 1 : index
    %c0_9 = arith.constant 0 : index
    %12 = vector.load %arg5[%c1, %c0_9] : memref<3x64xf32, #tpu.memory_space<vmem>>, vector<1x32xf32>
    %13 = vector.broadcast %12 : vector<1x32xf32> to vector<8x32xf32>
    %14 = arith.addf %11, %13 : vector<8x32xf32>
    %cst_10 = arith.constant 0.000000e+00 : f32
    %15 = vector.broadcast %cst_10 : f32 to vector<8x32xf32>
    %16 = arith.maximumf %14, %15 : vector<8x32xf32>
    %17 = arith.truncf %16 : vector<8x32xf32> to vector<8x32xbf16>
    %c0_11 = arith.constant 0 : index
    %c0_12 = arith.constant 0 : index
    %18 = vector.load %arg4[%c0_11, %c0_12] : memref<32x16xbf16, #tpu.memory_space<vmem>>, vector<32x16xbf16>
    %cst_13 = arith.constant dense<0.000000e+00> : vector<8x16xf32>
    %19 = tpu.matmul %17, %18, %cst_13 {dimension_numbers = #tpu.dot_dimension_numbers<[1], [0], [0], [1], [0, 0, 1, 1], [], []>} : vector<8x32xbf16>, vector<32x16xbf16>, vector<8x16xf32> -> vector<8x16xf32>
    %c2 = arith.constant 2 : index
    %c0_14 = arith.constant 0 : index
    %20 = vector.load %arg5[%c2, %c0_14] : memref<3x64xf32, #tpu.memory_space<vmem>>, vector<1x16xf32>
    %21 = vector.broadcast %20 : vector<1x16xf32> to vector<8x16xf32>
    %22 = arith.addf %19, %21 : vector<8x16xf32>
    %c0_15 = arith.constant 0 : index
    %c0_16 = arith.constant 0 : index
    %23 = vector.load %arg6[%c0_15, %c0_16] : memref<8x16xf32, #tpu.memory_space<vmem>>, vector<8x16xf32>
    tpu.vector_store %arg6[%c0_15, %c0_16], %22 {strides = array<i32>} : memref<8x16xf32, #tpu.memory_space<vmem>>, vector<8x16xf32>,
    return
  }
  func.func @transform_0(%arg0: i32) -> (i32, i32) {
    %c0_i32 = arith.constant 0 : i32
    %c0_i32_0 = arith.constant 0 : i32
    return %arg0, %c0_i32 : i32, i32
  }
  func.func @transform_1(%arg0: i32) -> (i32, i32) {
    %c0_i32 = arith.constant 0 : i32
    %c0_i32_0 = arith.constant 0 : i32
    %c0_i32_1 = arith.constant 0 : i32
    return %c0_i32, %c0_i32_0 : i32, i32
  }
  func.func @transform_2(%arg0: i32) -> (i32, i32) {
    %c0_i32 = arith.constant 0 : i32
    %c0_i32_0 = arith.constant 0 : i32
    %c0_i32_1 = arith.constant 0 : i32
    return %c0_i32, %c0_i32_0 : i32, i32
  }
  func.func @transform_3(%arg0: i32) -> (i32, i32) {
    %c0_i32 = arith.constant 0 : i32
    %c0_i32_0 = arith.constant 0 : i32
    %c0_i32_1 = arith.constant 0 : i32
    return %c0_i32, %c0_i32_0 : i32, i32
  }
  func.func @transform_4(%arg0: i32) -> (i32, i32) {
    %c0_i32 = arith.constant 0 : i32
    %c0_i32_0 = arith.constant 0 : i32
    %c0_i32_1 = arith.constant 0 : i32
    return %c0_i32, %c0_i32_0 : i32, i32
  }
  func.func @transform_5(%arg0: i32) -> (i32, i32) {
    %c0_i32 = arith.constant 0 : i32
    %c0_i32_0 = arith.constant 0 : i32
    return %arg0, %c0_i32 : i32, i32
  }
}

</mosaic_0001>

<llo_original>
// kernel: tpu_custom_call.1
$region0: #{tpu_custom_call.1}
  #allocation0 [shape = 'u32[]', space=smem, size = 0x4, offset = 0x4, fixed_abs, tag = 'smem constant byte address 0x4 - core index']
  #allocation1 [shape = 'u32[144,128]{1,0:T(1,128)}', space=vmem, size = 0x12000, scoped, tag = 'internal scratch']
  %s0 = inlined_call_operand.vmem [shape: f32[8,32], index: 0, kind: input, shape index: {}]
  %s1 = inlined_call_operand.vmem [shape: bf16[32,64], index: 1, kind: input, shape index: {}]
  %s2 = inlined_call_operand.vmem [shape: bf16[64,32], index: 2, kind: input, shape index: {}]
  %s3 = inlined_call_operand.vmem [shape: bf16[32,16], index: 3, kind: input, shape index: {}]
  %s4 = inlined_call_operand.vmem [shape: f32[3,64], index: 4, kind: input, shape index: {}]
  %s5 = inlined_call_operand.hbm [shape: f32[8,16], index: 5, kind: output, shape index: {}]
  %s6 = sld [smem:[#allocation0]]
  $region30: #{tpu_custom_call.1} parent=0
    _
  %s8 = ssub.s32 1, %s6
  %s9 = scalar_select 0, %s8, %s6
  $region1: #{tpu_custom_call.1} parent=0
    #allocation2 [shape = 'u8[4096]{0}', space=vmem, size = 0x1000, scoped, tag = 'output window, operand 0, single buffered']
    #allocation3 [shape = 's32[1]{0}', space=sflag, size = 0x4, scoped, tag = 'scoped memory for tpu_custom_call.1']
    %10 = vsyncpa [#allocation3], 0
    // Predicated region
    $region2: #{tpu_custom_call.1} parent=1 // pred_check
      _
    $region3: #{tpu_custom_call.1} parent=1 // pred_check_branch
      %12 = sbr.rel (0) target = $region5
    $region4: #{tpu_custom_call.1} parent=1 // pred_region
      _
    $region5: #{tpu_custom_call.1} parent=1 // pred_fallthru
      _
    // Predicated region
    $region6: #{tpu_custom_call.1} parent=1 // pred_check
      _
    $region7: #{tpu_custom_call.1} parent=1 // pred_check_branch
      %14 = sbr.rel (0) target = $region9
    $region8: #{tpu_custom_call.1} parent=1 // pred_region
      _
    $region9: #{tpu_custom_call.1} parent=1 // pred_fallthru
      _
    // Predicated region
    $region10: #{tpu_custom_call.1} parent=1 // pred_check
      _
    $region11: #{tpu_custom_call.1} parent=1 // pred_check_branch
      %16 = sbr.rel (0) target = $region13
    $region12: #{tpu_custom_call.1} parent=1 // pred_region
      _
    $region13: #{tpu_custom_call.1} parent=1 // pred_fallthru
      _
    // Predicated region
    $region14: #{tpu_custom_call.1} parent=1 // pred_check
      _
    $region15: #{tpu_custom_call.1} parent=1 // pred_check_branch
      %18 = sbr.rel (0) target = $region17
    $region16: #{tpu_custom_call.1} parent=1 // pred_region
      _
    $region17: #{tpu_custom_call.1} parent=1 // pred_fallthru
      _
    // Predicated region
    $region18: #{tpu_custom_call.1} parent=1 // pred_check
      _
    $region19: #{tpu_custom_call.1} parent=1 // pred_check_branch
      %20 = sbr.rel (0) target = $region21
    $region20: #{tpu_custom_call.1} parent=1 // pred_region
      _
    $region21: #{tpu_custom_call.1} parent=1 // pred_fallthru
      _
    %v22 = vld [vmem:[%s0] sm:$0xff]
    %v23 = vpack.c.bf16 %v22, %v22
    %v24 = vld [vmem:[%s1] sm:$0xf]
    %v25 = vld [vmem:[%s1 + $0x4] sm:$0xf]
    %v26 = vld [vmem:[%s1 + $0x8] sm:$0xf]
    %v27 = vld [vmem:[%s1 + $0xc] sm:$0xf]
    %v28 = vld [vmem:[%s4] sm:$0x1]
    %v29 = vlaneseq
    %v30 = vshrl.u32 %v29, 7
    %v31 = vsub.s32 0, %v30
    %v32 = vrot.slane %v28, %v31
    %v37 = vunpack.c.l.b16 %v24
    %v38 = vunpack.c.l.b16 %v25
    %v39 = vunpack.c.l.b16 %v26
    %v40 = vunpack.c.l.b16 %v27
    %v41 = vpack.c.b16 %v38, %v37
    %v42 = vpack.c.b16 %v40, %v39
    %vm45 = vcmask 261120
    %v47 = vsel %vm45, %v23, 0
    %49 = vmatprep.subr.bf16.mxu0 0
    %50 = vmatpush1.bf16.msra.mxu0 %v41
    %51 = vmatprep.subr.bf16.mxu0 0
    %52 = vmatpush1.bf16.msra.mxu0 %v42
    %53 = vmatprep.subr.bf16.mxu0 0
    %54 = vmatpush1.bf16.msra.mxu0 0
    %55 = vmatprep.subr.bf16.mxu0 0
    %56 = vmatpush1.bf16.msra.mxu0 0
    %57 = vmatprep.subr.bf16.mxu0 0
    %58 = vmatpush1.bf16.msra.mxu0 0
    %59 = vmatprep.subr.bf16.mxu0 0
    %60 = vmatpush1.bf16.msra.mxu0 0
    %61 = vmatprep.subr.bf16.mxu0 0
    %62 = vmatpush1.bf16.msra.mxu0 0
    %63 = vmatprep.subr.bf16.mxu0 0
    %64 = vmatpush1.bf16.msra.mxu0 0
    %65 = vmatprep.subr.bf16.mxu0 0
    %66 = vmatpush1.bf16.msra.mxu0 0
    %67 = vmatprep.subr.bf16.mxu0 0
    %68 = vmatpush1.bf16.msra.mxu0 0
    %69 = vmatprep.subr.bf16.mxu0 0
    %70 = vmatpush1.bf16.msra.mxu0 0
    %71 = vmatprep.subr.bf16.mxu0 0
    %72 = vmatpush1.bf16.msra.mxu0 0
    %73 = vmatprep.subr.bf16.mxu0 0
    %74 = vmatpush1.bf16.msra.mxu0 0
    %75 = vmatprep.subr.bf16.mxu0 0
    %76 = vmatpush1.bf16.msra.mxu0 0
    %77 = vmatprep.subr.bf16.mxu0 0
    %78 = vmatpush1.bf16.msra.mxu0 0
    %79 = vmatprep.subr.bf16.mxu0 0
    %80 = vmatpush1.bf16.msra.mxu0 0
    %81 = vmatprep.mubr.bf16.mxu0 0
    %82 = vmatmul.mubr.bf16.gmra.mrb[0].mxu0 %v47
    %v83 = vpop.f32.mrb[0].mxu0
    %v84 = vadd.f32 %v32, %v83
    %v85 = vpop.f32.mrb[0].mxu0
    %v86 = vpop.f32.mrb[0].mxu0
    %v87 = vpop.f32.mrb[0].mxu0
    %88 = vdwg.mxu0
    %v89 = vmax.f32 %v84, 0.0
    %v90 = vpack.c.bf16 %v89, %v89
    %v91 = vld [vmem:[%s2] sm:$0xf]
    %v92 = vld [vmem:[%s2 + $0x4] sm:$0xf]
    %v93 = vld [vmem:[%s2 + $0x8] sm:$0xf]
    %v94 = vld [vmem:[%s2 + $0xc] sm:$0xf]
    %v95 = vld [vmem:[%s2 + $0x10] sm:$0xf]
    %v96 = vld [vmem:[%s2 + $0x14] sm:$0xf]
    %v97 = vld [vmem:[%s2 + $0x18] sm:$0xf]
    %v98 = vld [vmem:[%s2 + $0x1c] sm:$0xf]
    %v99 = vld [vmem:[%s4 + $0x1] sm:$0x1]
    %v100 = vlaneseq
    %v101 = vshrl.u32 %v100, 7
    %v102 = vsub.s32 0, %v101
    %v103 = vrot.slane %v99, %v102
    %v112 = vunpack.c.l.b16 %v91
    %v113 = vunpack.c.l.b16 %v92
    %v114 = vunpack.c.l.b16 %v93
    %v115 = vunpack.c.l.b16 %v94
    %v116 = vunpack.c.l.b16 %v95
    %v117 = vunpack.c.l.b16 %v96
    %v118 = vunpack.c.l.b16 %v97
    %v119 = vunpack.c.l.b16 %v98
    %v120 = vpack.c.b16 %v113, %v112
    %v121 = vpack.c.b16 %v115, %v114
    %v122 = vpack.c.b16 %v117, %v116
    %v123 = vpack.c.b16 %v119, %v118
    %vm128 = vcmask 523264
    %v130 = vsel %vm128, %v90, 0
    %132 = vmatprep.subr.bf16.mxu0 0
    %133 = vmatpush1.bf16.msra.mxu0 %v120
    %134 = vmatprep.subr.bf16.mxu0 0
    %135 = vmatpush1.bf16.msra.mxu0 %v121
    %136 = vmatprep.subr.bf16.mxu0 0
    %137 = vmatpush1.bf16.msra.mxu0 %v122
    %138 = vmatprep.subr.bf16.mxu0 0
    %139 = vmatpush1.bf16.msra.mxu0 %v123
    %140 = vmatprep.subr.bf16.mxu0 0
    %141 = vmatpush1.bf16.msra.mxu0 0
    %142 = vmatprep.subr.bf16.mxu0 0
    %143 = vmatpush1.bf16.msra.mxu0 0
    %144 = vmatprep.subr.bf16.mxu0 0
    %145 = vmatpush1.bf16.msra.mxu0 0
    %146 = vmatprep.subr.bf16.mxu0 0
    %147 = vmatpush1.bf16.msra.mxu0 0
    %148 = vmatprep.subr.bf16.mxu0 0
    %149 = vmatpush1.bf16.msra.mxu0 0
    %150 = vmatprep.subr.bf16.mxu0 0
    %151 = vmatpush1.bf16.msra.mxu0 0
    %152 = vmatprep.subr.bf16.mxu0 0
    %153 = vmatpush1.bf16.msra.mxu0 0
    %154 = vmatprep.subr.bf16.mxu0 0
    %155 = vmatpush1.bf16.msra.mxu0 0
    %156 = vmatprep.subr.bf16.mxu0 0
    %157 = vmatpush1.bf16.msra.mxu0 0
    %158 = vmatprep.subr.bf16.mxu0 0
    %159 = vmatpush1.bf16.msra.mxu0 0
    %160 = vmatprep.subr.bf16.mxu0 0
    %161 = vmatpush1.bf16.msra.mxu0 0
    %162 = vmatprep.subr.bf16.mxu0 0
    %163 = vmatpush1.bf16.msra.mxu0 0
    %164 = vmatprep.mubr.bf16.mxu0 0
    %165 = vmatmul.mubr.bf16.gmra.mrb[0].mxu0 %v130
    %v166 = vpop.f32.mrb[0].mxu0
    %v167 = vadd.f32 %v103, %v166
    %v168 = vpop.f32.mrb[0].mxu0
    %v169 = vpop.f32.mrb[0].mxu0
    %v170 = vpop.f32.mrb[0].mxu0
    %171 = vdwg.mxu0
    %v172 = vmax.f32 %v167, 0.0
    %v173 = vpack.c.bf16 %v172, %v172
    %v174 = vld [vmem:[%s3] sm:$0xf]
    %v175 = vld [vmem:[%s3 + $0x4] sm:$0xf]
    %v176 = vld [vmem:[%s3 + $0x8] sm:$0xf]
    %v177 = vld [vmem:[%s3 + $0xc] sm:$0xf]
    %v178 = vld [vmem:[%s4 + $0x2] sm:$0x1]
    %v179 = vlaneseq
    %v180 = vshrl.u32 %v179, 7
    %v181 = vsub.s32 0, %v180
    %v182 = vrot.slane %v178, %v181
    %v187 = vunpack.c.l.b16 %v174
    %v188 = vunpack.c.l.b16 %v175
    %v189 = vunpack.c.l.b16 %v176
    %v190 = vunpack.c.l.b16 %v177
    %v191 = vpack.c.b16 %v188, %v187
    %v192 = vpack.c.b16 %v190, %v189
    %v196 = vsel %vm45, %v173, 0
    %198 = vmatprep.subr.bf16.mxu0 0
    %199 = vmatpush1.bf16.msra.mxu0 %v191
    %200 = vmatprep.subr.bf16.mxu0 0
    %201 = vmatpush1.bf16.msra.mxu0 %v192
    %202 = vmatprep.subr.bf16.mxu0 0
    %203 = vmatpush1.bf16.msra.mxu0 0
    %204 = vmatprep.subr.bf16.mxu0 0
    %205 = vmatpush1.bf16.msra.mxu0 0
    %206 = vmatprep.subr.bf16.mxu0 0
    %207 = vmatpush1.bf16.msra.mxu0 0
    %208 = vmatprep.subr.bf16.mxu0 0
    %209 = vmatpush1.bf16.msra.mxu0 0
    %210 = vmatprep.subr.bf16.mxu0 0
    %211 = vmatpush1.bf16.msra.mxu0 0
    %212 = vmatprep.subr.bf16.mxu0 0
    %213 = vmatpush1.bf16.msra.mxu0 0
    %214 = vmatprep.subr.bf16.mxu0 0
    %215 = vmatpush1.bf16.msra.mxu0 0
    %216 = vmatprep.subr.bf16.mxu0 0
    %217 = vmatpush1.bf16.msra.mxu0 0
    %218 = vmatprep.subr.bf16.mxu0 0
    %219 = vmatpush1.bf16.msra.mxu0 0
    %220 = vmatprep.subr.bf16.mxu0 0
    %221 = vmatpush1.bf16.msra.mxu0 0
    %222 = vmatprep.subr.bf16.mxu0 0
    %223 = vmatpush1.bf16.msra.mxu0 0
    %224 = vmatprep.subr.bf16.mxu0 0
    %225 = vmatpush1.bf16.msra.mxu0 0
    %226 = vmatprep.subr.bf16.mxu0 0
    %227 = vmatpush1.bf16.msra.mxu0 0
    %228 = vmatprep.subr.bf16.mxu0 0
    %229 = vmatpush1.bf16.msra.mxu0 0
    %230 = vmatprep.mubr.bf16.mxu0 0
    %231 = vmatmul.mubr.bf16.gmra.mrb[0].mxu0 %v196
    %v232 = vpop.f32.mrb[0].mxu0
    %v233 = vadd.f32 %v182, %v232
    %v234 = vpop.f32.mrb[0].mxu0
    %v235 = vpop.f32.mrb[0].mxu0
    %v236 = vpop.f32.mrb[0].mxu0
    %237 = vdwg.mxu0
    %vm238 = vcmask 130048
    %239 = vst.msk [vmem:[#allocation2] sm:$0xff] %vm238, %v233
    // Predicated region
    $region22: #{tpu_custom_call.1} parent=1 // pred_check
      _
    $region23: #{tpu_custom_call.1} parent=1 // pred_check_branch
      %241 = sbr.rel (0) target = $region25
    $region24: #{tpu_custom_call.1} parent=1 // pred_region
      %s243 = ssub.s32 128, 128
      %244 = vsyncadd [#allocation3], %s243
      %s246 = sshll.u32 [#allocation2], 4
      %s247 = int_to_ptr.vmem [resolvable:$true] %s246
      %249 = dma.vmem_to_hbm [thread:$0]  %s247, 128, %s5, [#allocation3]
    $region25: #{tpu_custom_call.1} parent=1 // pred_fallthru
      _
    // Predicated region
    $region26: #{tpu_custom_call.1} parent=1 // pred_check
      _
    $region27: #{tpu_custom_call.1} parent=1 // pred_check_branch
      %251 = sbr.rel (0) target = $region29
    $region28: #{tpu_custom_call.1} parent=1 // pred_region
      %252 = dma.done [#allocation3], 128
    $region29: #{tpu_custom_call.1} parent=1 // pred_fallthru
      _
    %253 = vsyncpa [#allocation3], 1

</llo_original>
